<compile_context>
chip_gen: v7x
topology: tpu7x:2x2x1
jax: 0.10.0
libtpu: 0.0.40
codegen_flags: <defaults>
</compile_context>

<pallas_src>
import functools

import jax
import jax.numpy as jnp
from jax.experimental import pallas as pl
from jax.experimental.pallas import tpu as pltpu

BN_EPS = 1e-5

# See header comment: VMEM is not the constraint at this width; per-grid-step
# overhead is, so default to large batch tiles.
DEFAULT_TILE_B = 4096


def _round_up(x, m):
    return ((x + m - 1) // m) * m


def _cdiv(a, b):
    return -(-a // b)


# --------------------------------------------------------------------------- #
# Kernel
# --------------------------------------------------------------------------- #
def _global_feature_kernel(cat_ref, real_ref, p_ref, out_ref, *,
                           meta, dims, fc3_as_reduce):
    """One batch tile of the full forward pass.

    cat_ref : (TILE_B, C_cat)      one-hot region input
    real_ref: (TILE_B, C_real)     real-valued input
    p_ref   : (P_rows, 128)        packed parameter slab (static layout in `meta`)
    out_ref : (TILE_B, O_total)    [ real_out | real_emb | cat_recon | cat_emb ]
    """
    H_cat, H_real, O_cat, O_real = dims

    def param(name):
        off, r, c = meta[name]          # static Python ints -> static ref slice
        return p_ref[off:off + r, :c]

    cat_x = cat_ref[...]
    real_x = real_ref[...]

    # categorical_embedding = sigmoid(ae_in(categorical_input))
    emb = jax.nn.sigmoid(
        jnp.dot(cat_x, param("w_ae_in"), preferred_element_type=jnp.float32)
        + param("b_ae_in"))

    # One fused dot for the two matmuls that share LHS = emb:
    #   columns [0, O_cat)           -> ae_out logits
    #   columns [O_cat, O_cat+H_real)-> folded-fc1 contribution of emb
    fused = jnp.dot(emb, param("w_emb_fused"),
                    preferred_element_type=jnp.float32)

    # categorical_recon = softmax(ae_out(emb), dim=1)   (numerically stable)
    logits = fused[:, 0:O_cat] + param("b_ae_out")
    m = jnp.max(logits, axis=1, keepdims=True)
    e = jnp.exp(logits - m)
    recon = e * pl.reciprocal(jnp.sum(e, axis=1, keepdims=True), approx=False)

    # fc1 with BatchNorm1d (eval) folded into the weights; the original
    # cat([emb, real], dim=1) @ W is the fused-dot slice + one more dot.
    h = (fused[:, O_cat:O_cat + H_real]
         + jnp.dot(real_x, param("w_fc1_bot"), preferred_element_type=jnp.float32)
         + param("b_fc1"))
    h = jnp.maximum(h, 0.0)

    # fc2 / fc21 / fc22 (+ReLU); dropout == identity in eval mode.
    h = jnp.maximum(
        jnp.dot(h, param("w_fc2"), preferred_element_type=jnp.float32)
        + param("b_fc2"), 0.0)
    h = jnp.maximum(
        jnp.dot(h, param("w_fc21"), preferred_element_type=jnp.float32)
        + param("b_fc21"), 0.0)
    h = jnp.maximum(
        jnp.dot(h, param("w_fc22"), preferred_element_type=jnp.float32)
        + param("b_fc22"), 0.0)

    if fc3_as_reduce:
        # 16 -> 1 projection on the VPU/XLU (lane reduce) instead of the MXU.
        real_out = (jnp.sum(h * param("w_fc3_row"), axis=-1, keepdims=True)
                    + param("b_fc3"))
    else:
        real_out = (jnp.dot(h, param("w_fc3"), preferred_element_type=jnp.float32)
                    + param("b_fc3"))

    # Lane-dense packed output: [ real_out | real_emb | cat_recon | cat_emb ]
    o1 = O_real
    o2 = o1 + H_real
    o3 = o2 + O_cat
    o4 = o3 + H_cat
    out_ref[:, 0:o1] = real_out
    out_ref[:, o1:o2] = h
    out_ref[:, o2:o3] = recon
    out_ref[:, o3:o4] = emb


# --------------------------------------------------------------------------- #
# Parameter packing (one-time, at model-load)
# --------------------------------------------------------------------------- #
def _pack_params(named, lane=128):
    """Pack (name, 2D array) pairs into one (rows, 128)-lane f32 slab.

    Each array's rows are padded to a multiple of 8 (sublane-aligned static
    slices); columns are zero-padded to a common 128-lane width.  Returns
    (slab, meta) where meta[name] = (row_offset, rows, cols) as Python ints.
    """
    max_cols = max(a.shape[1] for _, a in named)
    width = _round_up(max_cols, lane)
    bufs, meta, off = [], {}, 0
    for name, a in named:
        r, c = a.shape
        rp = _round_up(r, 8)
        buf = jnp.zeros((rp, width), jnp.float32).at[:r, :c].set(
            a.astype(jnp.float32))
        bufs.append(buf)
        meta[name] = (off, r, c)
        off += rp
    return jnp.concatenate(bufs, axis=0), meta


def prepare_global_feature_params(params):
    """Fold BatchNorm, split/fuse fc1, pack everything into one VMEM slab.

    Call ONCE at model-load time; the result is reused by every forward call
    (no per-call packing / folding HBM traffic).
    """
    H_cat = params["ae_in"][0].shape[1]
    O_cat = params["ae_out"][0].shape[1]
    H_real = params["fc1"][0].shape[1]
    O_real = params["fc3"][0].shape[1]

    # ---- fold BatchNorm1d (eval mode) into fc1 -----------------------------
    gamma, beta, rmean, rvar = params["bn1"]
    scale = gamma * jax.lax.rsqrt(rvar + BN_EPS)          # (1, H_real)
    w_fc1, b_fc1 = params["fc1"]
    w_fc1f = w_fc1 * scale                                # scale columns
    b_fc1f = (b_fc1 - rmean) * scale + beta

    # ---- split folded fc1 so the torch.cat becomes two summed dots ---------
    w_fc1_top = w_fc1f[:H_cat]                            # rows for categorical_embedding
    w_fc1_bot = w_fc1f[H_cat:]                            # rows for real_input

    # ---- fuse the two matmuls that share LHS = emb --------------------------
    w_emb_fused = jnp.concatenate([params["ae_out"][0], w_fc1_top], axis=1)

    fc3_as_reduce = (O_real == 1)

    named = [
        ("w_ae_in", params["ae_in"][0]), ("b_ae_in", params["ae_in"][1]),
        ("w_emb_fused", w_emb_fused), ("b_ae_out", params["ae_out"][1]),
        ("w_fc1_bot", w_fc1_bot), ("b_fc1", b_fc1f),
        ("w_fc2", params["fc2"][0]), ("b_fc2", params["fc2"][1]),
        ("w_fc21", params["fc21"][0]), ("b_fc21", params["fc21"][1]),
        ("w_fc22", params["fc22"][0]), ("b_fc22", params["fc22"][1]),
    ]
    if fc3_as_reduce:
        named.append(("w_fc3_row", params["fc3"][0].T))   # (1, H_real)
    else:
        named.append(("w_fc3", params["fc3"][0]))
    named.append(("b_fc3", params["fc3"][1]))

    slab, meta = _pack_params(named)
    return {
        "slab": slab,
        "meta": meta,
        "dims": (H_cat, H_real, O_cat, O_real),
        "fc3_as_reduce": fc3_as_reduce,
    }


# --------------------------------------------------------------------------- #
# Parameters (deterministic synthetic init; Linear weights stored as (in, out))
# --------------------------------------------------------------------------- #
def init_params(key, input_size_real, input_size_categorical,
                output_size_real, output_size_categorical,
                hidden_size_real=16, hidden_size_categorical=16):
    keys = jax.random.split(key, 18)

    def lin(kw, kb, n_in, n_out):
        w = 0.1 * jax.random.normal(kw, (n_in, n_out), jnp.float32)
        b = 0.1 * jax.random.normal(kb, (1, n_out), jnp.float32)
        return w, b

    p = {}
    p["ae_in"] = lin(keys[0], keys[1], input_size_categorical, hidden_size_categorical)
    p["ae_out"] = lin(keys[2], keys[3], hidden_size_categorical, output_size_categorical)
    p["fc1"] = lin(keys[4], keys[5],
                   input_size_real + hidden_size_categorical, hidden_size_real)
    p["fc2"] = lin(keys[6], keys[7], hidden_size_real, hidden_size_real)
    p["fc21"] = lin(keys[8], keys[9], hidden_size_real, hidden_size_real)
    p["fc22"] = lin(keys[10], keys[11], hidden_size_real, hidden_size_real)
    p["fc3"] = lin(keys[12], keys[13], hidden_size_real, output_size_real)
    # BatchNorm1d(affine=True) eval-mode state; non-trivial to exercise BN folding.
    p["bn1"] = (
        1.0 + 0.1 * jax.random.normal(keys[14], (1, hidden_size_real), jnp.float32),   # gamma
        0.1 * jax.random.normal(keys[15], (1, hidden_size_real), jnp.float32),         # beta
        0.1 * jax.random.normal(keys[16], (1, hidden_size_real), jnp.float32),         # running_mean
        1.0 + 0.1 * jnp.abs(jax.random.normal(keys[17], (1, hidden_size_real), jnp.float32)),  # running_var
    )
    return p


# --------------------------------------------------------------------------- #
# Wrapper
# --------------------------------------------------------------------------- #
def _choose_tile(B, tile_b):
    """Pick the batch tile: big, sublane-aligned, >=2 (prefer even #) grid steps."""
    tile_b = max(8, min(_round_up(tile_b, 8), _round_up(B, 8)))
    if B > 8:
        # Guarantee at least 2 grid steps so both v7x TensorCores get work.
        tile_b = min(tile_b, _round_up(_cdiv(B, 2), 8))
    n = _cdiv(B, tile_b)
    if n > 1 and n % 2:
        # Prefer an even tile count for 2-TensorCore load balance.
        tile_b = _round_up(_cdiv(B, n + 1), 8)
        n = _cdiv(B, tile_b)
    return tile_b, n


def global_feature_module_packed(real_input, categorical_input, prepared,
                                 *, tile_b=DEFAULT_TILE_B):
    """Forward pass; returns one lane-dense (B, O_real+H_real+O_cat+H_cat) slab
    laid out as [ real_out | real_emb | cat_recon | cat_emb ]."""
    B, C_real = real_input.shape
    _, C_cat = categorical_input.shape
    H_cat, H_real, O_cat, O_real = prepared["dims"]
    out_total = O_real + H_real + O_cat + H_cat
    slab = prepared["slab"]

    real_input = real_input.astype(jnp.float32)
    categorical_input = categorical_input.astype(jnp.float32)

    tile_b, n_tiles = _choose_tile(B, tile_b)
    grid = (n_tiles,)   # ragged last block handled by Pallas (row-independent math)

    kernel = functools.partial(
        _global_feature_kernel,
        meta=prepared["meta"],
        dims=prepared["dims"],
        fc3_as_reduce=prepared["fc3_as_reduce"],
    )

    packed = pl.pallas_call(
        kernel,
        out_shape=jax.ShapeDtypeStruct((B, out_total), jnp.float32),
        grid=grid,
        in_specs=[
            pl.BlockSpec((tile_b, C_cat), lambda i: (i, 0)),   # categorical input tile
            pl.BlockSpec((tile_b, C_real), lambda i: (i, 0)),  # real input tile
            pl.BlockSpec(slab.shape, lambda i: (0, 0)),        # params: resident, one DMA
        ],
        out_specs=pl.BlockSpec((tile_b, out_total), lambda i: (i, 0)),
        compiler_params=pltpu.CompilerParams(
            dimension_semantics=("parallel",),                 # megacore sharding on v7x
        ),
    )(categorical_input, real_input, slab)
    return packed


def split_outputs(packed, dims):
    H_cat, H_real, O_cat, O_real = dims
    o1 = O_real
    o2 = o1 + H_real
    o3 = o2 + O_cat
    return (packed[:, 0:o1], packed[:, o1:o2], packed[:, o2:o3], packed[:, o3:])


def global_feature_module(real_input, categorical_input, prepared,
                          *, tile_b=DEFAULT_TILE_B):
    """API-compatible forward: returns (real_out, real_emb, cat_recon, cat_emb).

    Prefer global_feature_module_packed() + fusing split_outputs into the
    consumer if the extra output-split HBM pass matters for your pipeline.
    """
    packed = global_feature_module_packed(real_input, categorical_input,
                                          prepared, tile_b=tile_b)
    return split_outputs(packed, prepared["dims"])


# --------------------------------------------------------------------------- #
# Pure-JAX reference (matches the PyTorch forward in eval mode)
# --------------------------------------------------------------------------- #
def _reference(real_input, categorical_input, params):
    def lin(x, wb):
        return x @ wb[0] + wb[1]

    emb = jax.nn.sigmoid(lin(categorical_input, params["ae_in"]))
    recon = jax.nn.softmax(lin(emb, params["ae_out"]), axis=1)
    x = jnp.concatenate([emb, real_input], axis=1)
    gamma, beta, rmean, rvar = params["bn1"]
    h = lin(x, params["fc1"])
    h = (h - rmean) / jnp.sqrt(rvar + BN_EPS) * gamma + beta
    h = jax.nn.relu(h)
    h = jax.nn.relu(lin(h, params["fc2"]))
    h = jax.nn.relu(lin(h, params["fc21"]))
    h = jax.nn.relu(lin(h, params["fc22"]))
    return lin(h, params["fc3"]), h, recon, emb


if __name__ == "__main__":
    input_size_real = 8            # past-K-weeks case counts + exogenous features
    input_size_categorical = 16    # one-hot region vector
    output_size_real = 1           # K-week-ahead forecast value
    output_size_categorical = 16   # autoencoder reconstruction of the one-hot
    hidden_real = 16
    hidden_cat = 16

    key = jax.random.PRNGKey(0)
    k_real, k_cat, k_params = jax.random.split(key, 3)

    params = init_params(k_params, input_size_real, input_size_categorical,
                         output_size_real, output_size_categorical,
                         hidden_real, hidden_cat)
    # One-time fold + pack (hoisted out of the per-call path).
    prepared = prepare_global_feature_params(params)

    # B=8 hits the exact single-tile path; B=12 and B=300 exercise the
    # >=2-tile split for v7x and the ragged (unpadded) last block.
    for B in (8, 12, 300):
        kr = jax.random.fold_in(k_real, B)
        kc = jax.random.fold_in(k_cat, B)
        real_input = jax.random.normal(kr, (B, input_size_real), jnp.float32)
        region_ids = jax.random.randint(kc, (B,), 0, input_size_categorical)
        categorical_input = jax.nn.one_hot(region_ids, input_size_categorical,
                                           dtype=jnp.float32)

        outs = global_feature_module(real_input, categorical_input, prepared)
        outs = jax.block_until_ready(outs)

        refs = _reference(real_input, categorical_input, params)
        for o, r in zip(outs, refs):
            assert o.shape == r.shape and o.dtype == r.dtype
            assert float(jnp.max(jnp.abs(o - r))) < 1e-5

    print("KERNEL_OK")
</pallas_src>

<mosaic_0001>
module attributes {stable_mosaic.version = 11 : i64} {
  func.func @_global_feature_kernel(%arg0: i32, %arg1: memref<8x16xf32, #tpu.memory_space<vmem>>, %arg2: memref<8x8xf32, #tpu.memory_space<vmem>>, %arg3: memref<152x128xf32, #tpu.memory_space<vmem>>, %arg4: memref<8x49xf32, #tpu.memory_space<vmem>>) attributes {dimension_semantics = [#tpu.dimension_semantics<parallel>], iteration_bounds = array<i64: 1>, scalar_prefetch = 0 : i64, scratch_operands = 0 : i64, tpu.core_type = #tpu.core_type<tc>, window_params = [{transform_indices = @transform_0, window_bounds = array<i64: 8, 16>}, {transform_indices = @transform_1, window_bounds = array<i64: 8, 8>}, {pipeline_mode = #tpu.pipeline_mode<synchronous>, transform_indices = @transform_2, window_bounds = array<i64: 152, 128>}, {transform_indices = @transform_3, window_bounds = array<i64: 8, 49>}]} {
    %c0 = arith.constant 0 : index
    %c0_0 = arith.constant 0 : index
    %0 = vector.load %arg1[%c0, %c0_0] : memref<8x16xf32, #tpu.memory_space<vmem>>, vector<8x16xf32>
    %c0_1 = arith.constant 0 : index
    %c0_2 = arith.constant 0 : index
    %1 = vector.load %arg2[%c0_1, %c0_2] : memref<8x8xf32, #tpu.memory_space<vmem>>, vector<8x8xf32>
    %c0_3 = arith.constant 0 : index
    %c0_4 = arith.constant 0 : index
    %2 = vector.load %arg3[%c0_3, %c0_4] : memref<152x128xf32, #tpu.memory_space<vmem>>, vector<16x16xf32>
    %cst = arith.constant dense<0.000000e+00> : vector<8x16xf32>
    %3 = tpu.matmul %0, %2, %cst {dimension_numbers = #tpu.dot_dimension_numbers<[1], [0], [0], [1], [0, 0, 1, 1], [], []>} : vector<8x16xf32>, vector<16x16xf32>, vector<8x16xf32> -> vector<8x16xf32>
    %c16 = arith.constant 16 : index
    %c0_5 = arith.constant 0 : index
    %4 = vector.load %arg3[%c16, %c0_5] : memref<152x128xf32, #tpu.memory_space<vmem>>, vector<1x16xf32>
    %5 = vector.broadcast %4 : vector<1x16xf32> to vector<8x16xf32>
    %6 = arith.addf %3, %5 : vector<8x16xf32>
    %7 = arith.negf %6 : vector<8x16xf32>
    %8 = math.exp %7 : vector<8x16xf32>
    %cst_6 = arith.constant 1.000000e+00 : f32
    %9 = vector.broadcast %cst_6 : f32 to vector<8x16xf32>
    %10 = arith.addf %9, %8 : vector<8x16xf32>
    %11 = arith.divf %9, %10 : vector<8x16xf32>
    %c24 = arith.constant 24 : index
    %c0_7 = arith.constant 0 : index
    %12 = vector.load %arg3[%c24, %c0_7] : memref<152x128xf32, #tpu.memory_space<vmem>>, vector<16x32xf32>
    %cst_8 = arith.constant dense<0.000000e+00> : vector<8x32xf32>
    %13 = tpu.matmul %11, %12, %cst_8 {dimension_numbers = #tpu.dot_dimension_numbers<[1], [0], [0], [1], [0, 0, 1, 1], [], []>} : vector<8x16xf32>, vector<16x32xf32>, vector<8x32xf32> -> vector<8x32xf32>
    %14 = vector.extract_strided_slice %13 {offsets = [0, 0], sizes = [8, 16], strides = [1, 1]} : vector<8x32xf32> to vector<8x16xf32>
    %c40 = arith.constant 40 : index
    %c0_9 = arith.constant 0 : index
    %15 = vector.load %arg3[%c40, %c0_9] : memref<152x128xf32, #tpu.memory_space<vmem>>, vector<1x16xf32>
    %16 = vector.broadcast %15 : vector<1x16xf32> to vector<8x16xf32>
    %17 = arith.addf %14, %16 : vector<8x16xf32>
    %cst_10 = arith.constant dense<0xFF800000> : vector<8xf32>
    %18 = vector.multi_reduction <maximumf>, %17, %cst_10 [1] : vector<8x16xf32> to vector<8xf32>
    %19 = vector.shape_cast %18 : vector<8xf32> to vector<8x1xf32>
    %20 = vector.broadcast %19 : vector<8x1xf32> to vector<8x16xf32>
    %21 = arith.subf %17, %20 : vector<8x16xf32>
    %22 = math.exp %21 : vector<8x16xf32>
    %cst_11 = arith.constant dense<0.000000e+00> : vector<8xf32>
    %23 = vector.multi_reduction <add>, %22, %cst_11 [1] : vector<8x16xf32> to vector<8xf32>
    %24 = vector.shape_cast %23 : vector<8xf32> to vector<8x1xf32>
    %25 = tpu.reciprocal %24 : vector<8x1xf32> -> vector<8x1xf32>
    %26 = vector.broadcast %25 : vector<8x1xf32> to vector<8x16xf32>
    %27 = arith.mulf %22, %26 : vector<8x16xf32>
    %28 = vector.extract_strided_slice %13 {offsets = [0, 16], sizes = [8, 16], strides = [1, 1]} : vector<8x32xf32> to vector<8x16xf32>
    %c48 = arith.constant 48 : index
    %c0_12 = arith.constant 0 : index
    %29 = vector.load %arg3[%c48, %c0_12] : memref<152x128xf32, #tpu.memory_space<vmem>>, vector<8x16xf32>
    %cst_13 = arith.constant dense<0.000000e+00> : vector<8x16xf32>
    %30 = tpu.matmul %1, %29, %cst_13 {dimension_numbers = #tpu.dot_dimension_numbers<[1], [0], [0], [1], [0, 0, 1, 1], [], []>} : vector<8x8xf32>, vector<8x16xf32>, vector<8x16xf32> -> vector<8x16xf32>
    %31 = arith.addf %28, %30 : vector<8x16xf32>
    %c56 = arith.constant 56 : index
    %c0_14 = arith.constant 0 : index
    %32 = vector.load %arg3[%c56, %c0_14] : memref<152x128xf32, #tpu.memory_space<vmem>>, vector<1x16xf32>
    %33 = vector.broadcast %32 : vector<1x16xf32> to vector<8x16xf32>
    %34 = arith.addf %31, %33 : vector<8x16xf32>
    %cst_15 = arith.constant 0.000000e+00 : f32
    %35 = vector.broadcast %cst_15 : f32 to vector<8x16xf32>
    %36 = arith.maximumf %34, %35 : vector<8x16xf32>
    %c64 = arith.constant 64 : index
    %c0_16 = arith.constant 0 : index
    %37 = vector.load %arg3[%c64, %c0_16] : memref<152x128xf32, #tpu.memory_space<vmem>>, vector<16x16xf32>
    %cst_17 = arith.constant dense<0.000000e+00> : vector<8x16xf32>
    %38 = tpu.matmul %36, %37, %cst_17 {dimension_numbers = #tpu.dot_dimension_numbers<[1], [0], [0], [1], [0, 0, 1, 1], [], []>} : vector<8x16xf32>, vector<16x16xf32>, vector<8x16xf32> -> vector<8x16xf32>
    %c80 = arith.constant 80 : index
    %c0_18 = arith.constant 0 : index
    %39 = vector.load %arg3[%c80, %c0_18] : memref<152x128xf32, #tpu.memory_space<vmem>>, vector<1x16xf32>
    %40 = vector.broadcast %39 : vector<1x16xf32> to vector<8x16xf32>
    %41 = arith.addf %38, %40 : vector<8x16xf32>
    %cst_19 = arith.constant 0.000000e+00 : f32
    %42 = vector.broadcast %cst_19 : f32 to vector<8x16xf32>
    %43 = arith.maximumf %41, %42 : vector<8x16xf32>
    %c88 = arith.constant 88 : index
    %c0_20 = arith.constant 0 : index
    %44 = vector.load %arg3[%c88, %c0_20] : memref<152x128xf32, #tpu.memory_space<vmem>>, vector<16x16xf32>
    %cst_21 = arith.constant dense<0.000000e+00> : vector<8x16xf32>
    %45 = tpu.matmul %43, %44, %cst_21 {dimension_numbers = #tpu.dot_dimension_numbers<[1], [0], [0], [1], [0, 0, 1, 1], [], []>} : vector<8x16xf32>, vector<16x16xf32>, vector<8x16xf32> -> vector<8x16xf32>
    %c104 = arith.constant 104 : index
    %c0_22 = arith.constant 0 : index
    %46 = vector.load %arg3[%c104, %c0_22] : memref<152x128xf32, #tpu.memory_space<vmem>>, vector<1x16xf32>
    %47 = vector.broadcast %46 : vector<1x16xf32> to vector<8x16xf32>
    %48 = arith.addf %45, %47 : vector<8x16xf32>
    %cst_23 = arith.constant 0.000000e+00 : f32
    %49 = vector.broadcast %cst_23 : f32 to vector<8x16xf32>
    %50 = arith.maximumf %48, %49 : vector<8x16xf32>
    %c112 = arith.constant 112 : index
    %c0_24 = arith.constant 0 : index
    %51 = vector.load %arg3[%c112, %c0_24] : memref<152x128xf32, #tpu.memory_space<vmem>>, vector<16x16xf32>
    %cst_25 = arith.constant dense<0.000000e+00> : vector<8x16xf32>
    %52 = tpu.matmul %50, %51, %cst_25 {dimension_numbers = #tpu.dot_dimension_numbers<[1], [0], [0], [1], [0, 0, 1, 1], [], []>} : vector<8x16xf32>, vector<16x16xf32>, vector<8x16xf32> -> vector<8x16xf32>
    %c128 = arith.constant 128 : index
    %c0_26 = arith.constant 0 : index
    %53 = vector.load %arg3[%c128, %c0_26] : memref<152x128xf32, #tpu.memory_space<vmem>>, vector<1x16xf32>
    %54 = vector.broadcast %53 : vector<1x16xf32> to vector<8x16xf32>
    %55 = arith.addf %52, %54 : vector<8x16xf32>
    %cst_27 = arith.constant 0.000000e+00 : f32
    %56 = vector.broadcast %cst_27 : f32 to vector<8x16xf32>
    %57 = arith.maximumf %55, %56 : vector<8x16xf32>
    %c136 = arith.constant 136 : index
    %c0_28 = arith.constant 0 : index
    %58 = vector.load %arg3[%c136, %c0_28] : memref<152x128xf32, #tpu.memory_space<vmem>>, vector<1x16xf32>
    %59 = vector.broadcast %58 : vector<1x16xf32> to vector<8x16xf32>
    %60 = arith.mulf %57, %59 : vector<8x16xf32>
    %cst_29 = arith.constant dense<0.000000e+00> : vector<8xf32>
    %61 = vector.multi_reduction <add>, %60, %cst_29 [1] : vector<8x16xf32> to vector<8xf32>
    %62 = vector.shape_cast %61 : vector<8xf32> to vector<8x1xf32>
    %c144 = arith.constant 144 : index
    %c0_30 = arith.constant 0 : index
    %63 = vector.load %arg3[%c144, %c0_30] : memref<152x128xf32, #tpu.memory_space<vmem>>, vector<1x1xf32>
    %64 = vector.broadcast %63 : vector<1x1xf32> to vector<8x1xf32>
    %65 = arith.addf %62, %64 : vector<8x1xf32>
    %c0_31 = arith.constant 0 : index
    %c0_32 = arith.constant 0 : index
    %66 = vector.load %arg4[%c0_31, %c0_32] : memref<8x49xf32, #tpu.memory_space<vmem>>, vector<8x1xf32>
    tpu.vector_store %arg4[%c0_31, %c0_32], %65 {strides = array<i32>} : memref<8x49xf32, #tpu.memory_space<vmem>>, vector<8x1xf32>,
    %c0_33 = arith.constant 0 : index
    %c1 = arith.constant 1 : index
    %67 = vector.load %arg4[%c0_33, %c1] : memref<8x49xf32, #tpu.memory_space<vmem>>, vector<8x16xf32>
    tpu.vector_store %arg4[%c0_33, %c1], %57 {strides = array<i32>} : memref<8x49xf32, #tpu.memory_space<vmem>>, vector<8x16xf32>,
    %c0_34 = arith.constant 0 : index
    %c17 = arith.constant 17 : index
    %68 = vector.load %arg4[%c0_34, %c17] : memref<8x49xf32, #tpu.memory_space<vmem>>, vector<8x16xf32>
    tpu.vector_store %arg4[%c0_34, %c17], %27 {strides = array<i32>} : memref<8x49xf32, #tpu.memory_space<vmem>>, vector<8x16xf32>,
    %c0_35 = arith.constant 0 : index
    %c33 = arith.constant 33 : index
    %69 = vector.load %arg4[%c0_35, %c33] : memref<8x49xf32, #tpu.memory_space<vmem>>, vector<8x16xf32>
    tpu.vector_store %arg4[%c0_35, %c33], %11 {strides = array<i32>} : memref<8x49xf32, #tpu.memory_space<vmem>>, vector<8x16xf32>,
    return
  }
  func.func @transform_0(%arg0: i32) -> (i32, i32) {
    %c0_i32 = arith.constant 0 : i32
    %c0_i32_0 = arith.constant 0 : i32
    return %arg0, %c0_i32 : i32, i32
  }
  func.func @transform_1(%arg0: i32) -> (i32, i32) {
    %c0_i32 = arith.constant 0 : i32
    %c0_i32_0 = arith.constant 0 : i32
    return %arg0, %c0_i32 : i32, i32
  }
  func.func @transform_2(%arg0: i32) -> (i32, i32) {
    %c0_i32 = arith.constant 0 : i32
    %c0_i32_0 = arith.constant 0 : i32
    %c0_i32_1 = arith.constant 0 : i32
    return %c0_i32, %c0_i32_0 : i32, i32
  }
  func.func @transform_3(%arg0: i32) -> (i32, i32) {
    %c0_i32 = arith.constant 0 : i32
    %c0_i32_0 = arith.constant 0 : i32
    return %arg0, %c0_i32 : i32, i32
  }
}

</mosaic_0001>

<llo_original>
// kernel: tpu_custom_call.1
$region0: #{tpu_custom_call.1}
  #allocation0 [shape = 'u32[]', space=smem, size = 0x4, offset = 0x4, fixed_abs, tag = 'smem constant byte address 0x4 - core index']
  #allocation1 [shape = 'u32[144,128]{1,0:T(1,128)}', space=vmem, size = 0x12000, scoped, tag = 'internal scratch']
  %s0 = inlined_call_operand.hbm [shape: f32[8,16], index: 0, kind: input, shape index: {}]
  %s1 = inlined_call_operand.hbm [shape: f32[8,8], index: 1, kind: input, shape index: {}]
  %s2 = inlined_call_operand.hbm [shape: f32[152,128], index: 2, kind: input, shape index: {}]
  %s3 = inlined_call_operand.hbm [shape: f32[8,49], index: 3, kind: output, shape index: {}]
  %s4 = sld [smem:[#allocation0]]
  $region34: #{tpu_custom_call.1} parent=0
    _
  %s6 = ssub.s32 1, %s4
  %s7 = scalar_select 0, %s6, %s4
  $region1: #{tpu_custom_call.1} parent=0
    #allocation2 [shape = 'u8[4096]{0}', space=vmem, size = 0x1000, scoped, tag = 'input window, operand 0, single buffered']
    #allocation3 [shape = 's32[1]{0}', space=sflag, size = 0x4, scoped, tag = 'scoped memory for tpu_custom_call.1']
    #allocation4 [shape = 's32[1]{0}', space=sflag, size = 0x4, scoped, tag = 'scoped memory for tpu_custom_call.1']
    #allocation5 [shape = 'u8[4096]{0}', space=vmem, size = 0x1000, scoped, tag = 'input window, operand 1, single buffered']
    #allocation6 [shape = 's32[1]{0}', space=sflag, size = 0x4, scoped, tag = 'scoped memory for tpu_custom_call.1']
    #allocation7 [shape = 'u8[77824]{0}', space=vmem, size = 0x13000, scoped, tag = 'input window, operand 2, single buffered']
    #allocation8 [shape = 'u8[4096]{0}', space=vmem, size = 0x1000, scoped, tag = 'output window, operand 0, single buffered']
    %8 = vsyncpa [#allocation3], 0
    %9 = vsyncpa [#allocation6], 0
    %10 = vsyncpa [#allocation4], 0
    // Predicated region
    $region2: #{tpu_custom_call.1} parent=1 // pred_check
      _
    $region3: #{tpu_custom_call.1} parent=1 // pred_check_branch
      %12 = sbr.rel (0) target = $region5
    $region4: #{tpu_custom_call.1} parent=1 // pred_region
      %s14 = ssub.s32 128, 128
      %15 = vsyncadd [#allocation3], %s14
      %s17 = sshll.u32 [#allocation2], 4
      %s18 = int_to_ptr.vmem [resolvable:$true] %s17
      %20 = dma.hbm_to_vmem [thread:$0]  %s0, 128, %s18, [#allocation3]
    $region5: #{tpu_custom_call.1} parent=1 // pred_fallthru
      _
    // Predicated region
    $region6: #{tpu_custom_call.1} parent=1 // pred_check
      _
    $region7: #{tpu_custom_call.1} parent=1 // pred_check_branch
      %22 = sbr.rel (0) target = $region9
    $region8: #{tpu_custom_call.1} parent=1 // pred_region
      %s24 = ssub.s32 128, 128
      %25 = vsyncadd [#allocation6], %s24
      %s27 = sshll.u32 [#allocation5], 4
      %s28 = int_to_ptr.vmem [resolvable:$true] %s27
      %30 = dma.hbm_to_vmem [thread:$0]  %s1, 128, %s28, [#allocation6]
    $region9: #{tpu_custom_call.1} parent=1 // pred_fallthru
      _
    // Predicated region
    $region10: #{tpu_custom_call.1} parent=1 // pred_check
      _
    $region11: #{tpu_custom_call.1} parent=1 // pred_check_branch
      %32 = sbr.rel (0) target = $region13
    $region12: #{tpu_custom_call.1} parent=1 // pred_region
      %s34 = ssub.s32 2432, 2432
      %35 = vsyncadd [#allocation6], %s34
      %s36 = sshll.u32 [#allocation7], 4
      %s37 = int_to_ptr.vmem [resolvable:$true] %s36
      %42 = dma.hbm_to_vmem [thread:$0]  %s2, 2432, %s37, [#allocation6], 128, 128, 8
    $region13: #{tpu_custom_call.1} parent=1 // pred_fallthru
      _
    // Predicated region
    $region14: #{tpu_custom_call.1} parent=1 // pred_check
      _
    $region15: #{tpu_custom_call.1} parent=1 // pred_check_branch
      %44 = sbr.rel (0) target = $region17
    $region16: #{tpu_custom_call.1} parent=1 // pred_region
      %45 = dma.done [#allocation3], 128
    $region17: #{tpu_custom_call.1} parent=1 // pred_fallthru
      _
    // Predicated region
    $region18: #{tpu_custom_call.1} parent=1 // pred_check
      _
    $region19: #{tpu_custom_call.1} parent=1 // pred_check_branch
      %47 = sbr.rel (0) target = $region21
    $region20: #{tpu_custom_call.1} parent=1 // pred_region
      %48 = dma.done [#allocation6], 128
    $region21: #{tpu_custom_call.1} parent=1 // pred_fallthru
      _
    // Predicated region
    $region22: #{tpu_custom_call.1} parent=1 // pred_check
      _
    $region23: #{tpu_custom_call.1} parent=1 // pred_check_branch
      %50 = sbr.rel (0) target = $region25
    $region24: #{tpu_custom_call.1} parent=1 // pred_region
      %51 = dma.done [#allocation6], 2432
    $region25: #{tpu_custom_call.1} parent=1 // pred_fallthru
      _
    %v52 = vld [vmem:[#allocation2] sm:$0xff]
    %v53 = vld [vmem:[#allocation5] sm:$0xff]
    %v54 = vld [vmem:[#allocation7] sm:$0xff]
    %v55 = vld [vmem:[#allocation7 + $0x8] sm:$0xff]
    %v56 = vld [vmem:[#allocation7 + $0x10] sm:$0x1]
    %v57 = vlaneseq
    %v58 = vshrl.u32 %v57, 7
    %v59 = vsub.s32 0, %v58
    %v60 = vrot.slane %v56, %v59
    %vm61 = vcmask 130048
    %v63 = vsel %vm61, %v52, 0
    %65 = vmatprep.subr.mxu0 0.0
    %66 = vmatpush1.msra.mxu0 %v54
    %67 = vmatprep.subr.mxu0 0.0
    %68 = vmatpush1.msra.mxu0 %v55
    %69 = vmatprep.subr.mxu0 0.0
    %70 = vmatpush1.msra.mxu0 0.0
    %71 = vmatprep.subr.mxu0 0.0
    %72 = vmatpush1.msra.mxu0 0.0
    %73 = vmatprep.subr.mxu0 0.0
    %74 = vmatpush1.msra.mxu0 0.0
    %75 = vmatprep.subr.mxu0 0.0
    %76 = vmatpush1.msra.mxu0 0.0
    %77 = vmatprep.subr.mxu0 0.0
    %78 = vmatpush1.msra.mxu0 0.0
    %79 = vmatprep.subr.mxu0 0.0
    %80 = vmatpush1.msra.mxu0 0.0
    %81 = vmatprep.subr.mxu0 0.0
    %82 = vmatpush1.msra.mxu0 0.0
    %83 = vmatprep.subr.mxu0 0.0
    %84 = vmatpush1.msra.mxu0 0.0
    %85 = vmatprep.subr.mxu0 0.0
    %86 = vmatpush1.msra.mxu0 0.0
    %87 = vmatprep.subr.mxu0 0.0
    %88 = vmatpush1.msra.mxu0 0.0
    %89 = vmatprep.subr.mxu0 0.0
    %90 = vmatpush1.msra.mxu0 0.0
    %91 = vmatprep.subr.mxu0 0.0
    %92 = vmatpush1.msra.mxu0 0.0
    %93 = vmatprep.subr.mxu0 0.0
    %94 = vmatpush1.msra.mxu0 0.0
    %95 = vmatprep.subr.mxu0 0.0
    %96 = vmatpush1.msra.mxu0 0.0
    %97 = vmatprep.subr.mxu0 0.0
    %98 = vmatpush1.msra.mxu0 0.0
    %99 = vmatprep.subr.mxu0 0.0
    %100 = vmatpush1.msra.mxu0 0.0
    %101 = vmatprep.subr.mxu0 0.0
    %102 = vmatpush1.msra.mxu0 0.0
    %103 = vmatprep.subr.mxu0 0.0
    %104 = vmatpush1.msra.mxu0 0.0
    %105 = vmatprep.subr.mxu0 0.0
    %106 = vmatpush1.msra.mxu0 0.0
    %107 = vmatprep.subr.mxu0 0.0
    %108 = vmatpush1.msra.mxu0 0.0
    %109 = vmatprep.subr.mxu0 0.0
    %110 = vmatpush1.msra.mxu0 0.0
    %111 = vmatprep.subr.mxu0 0.0
    %112 = vmatpush1.msra.mxu0 0.0
    %113 = vmatprep.subr.mxu0 0.0
    %114 = vmatpush1.msra.mxu0 0.0
    %115 = vmatprep.subr.mxu0 0.0
    %116 = vmatpush1.msra.mxu0 0.0
    %117 = vmatprep.subr.mxu0 0.0
    %118 = vmatpush1.msra.mxu0 0.0
    %119 = vmatprep.subr.mxu0 0.0
    %120 = vmatpush1.msra.mxu0 0.0
    %121 = vmatprep.subr.mxu0 0.0
    %122 = vmatpush1.msra.mxu0 0.0
    %123 = vmatprep.subr.mxu0 0.0
    %124 = vmatpush1.msra.mxu0 0.0
    %125 = vmatprep.subr.mxu0 0.0
    %126 = vmatpush1.msra.mxu0 0.0
    %127 = vmatprep.subr.mxu0 0.0
    %128 = vmatpush1.msra.mxu0 0.0
    %129 = vmatprep.mubr.f32.mxu0 0.0
    %130 = vmatmul.mubr.f32.gmra.mrb[0].mxu0 %v63
    %v131 = vpop.f32.mrb[0].mxu0
    %v132 = vadd.f32 %v60, %v131
    %v133 = vpop.f32.mrb[0].mxu0
    %134 = vdwg.mxu0
    %v135 = vxor.u32 %v132, 2147483648
    %v136 = vmul.f32 %v135, 1.442695
    %v137 = vpow.pop %v136
    %v138 = vadd.f32 %v137, 1.0
    %v139 = vrcp.pop %v138
    %v140 = vmul.f32 1.0, %v139
    %v141 = vld [vmem:[#allocation7 + $0x18] sm:$0xff]
    %v142 = vld [vmem:[#allocation7 + $0x20] sm:$0xff]
    %v144 = vsel %vm61, %v140, 0
    %146 = vmatprep.subr.mxu0 0.0
    %147 = vmatpush1.msra.mxu0 %v141
    %148 = vmatprep.subr.mxu0 0.0
    %149 = vmatpush1.msra.mxu0 %v142
    %150 = vmatprep.subr.mxu0 0.0
    %151 = vmatpush1.msra.mxu0 0.0
    %152 = vmatprep.subr.mxu0 0.0
    %153 = vmatpush1.msra.mxu0 0.0
    %154 = vmatprep.subr.mxu0 0.0
    %155 = vmatpush1.msra.mxu0 0.0
    %156 = vmatprep.subr.mxu0 0.0
    %157 = vmatpush1.msra.mxu0 0.0
    %158 = vmatprep.subr.mxu0 0.0
    %159 = vmatpush1.msra.mxu0 0.0
    %160 = vmatprep.subr.mxu0 0.0
    %161 = vmatpush1.msra.mxu0 0.0
    %162 = vmatprep.subr.mxu0 0.0
    %163 = vmatpush1.msra.mxu0 0.0
    %164 = vmatprep.subr.mxu0 0.0
    %165 = vmatpush1.msra.mxu0 0.0
    %166 = vmatprep.subr.mxu0 0.0
    %167 = vmatpush1.msra.mxu0 0.0
    %168 = vmatprep.subr.mxu0 0.0
    %169 = vmatpush1.msra.mxu0 0.0
    %170 = vmatprep.subr.mxu0 0.0
    %171 = vmatpush1.msra.mxu0 0.0
    %172 = vmatprep.subr.mxu0 0.0
    %173 = vmatpush1.msra.mxu0 0.0
    %174 = vmatprep.subr.mxu0 0.0
    %175 = vmatpush1.msra.mxu0 0.0
    %176 = vmatprep.subr.mxu0 0.0
    %177 = vmatpush1.msra.mxu0 0.0
    %178 = vmatprep.subr.mxu0 0.0
    %179 = vmatpush1.msra.mxu0 0.0
    %180 = vmatprep.subr.mxu0 0.0
    %181 = vmatpush1.msra.mxu0 0.0
    %182 = vmatprep.subr.mxu0 0.0
    %183 = vmatpush1.msra.mxu0 0.0
    %184 = vmatprep.subr.mxu0 0.0
    %185 = vmatpush1.msra.mxu0 0.0
    %186 = vmatprep.subr.mxu0 0.0
    %187 = vmatpush1.msra.mxu0 0.0
    %188 = vmatprep.subr.mxu0 0.0
    %189 = vmatpush1.msra.mxu0 0.0
    %190 = vmatprep.subr.mxu0 0.0
    %191 = vmatpush1.msra.mxu0 0.0
    %192 = vmatprep.subr.mxu0 0.0
    %193 = vmatpush1.msra.mxu0 0.0
    %194 = vmatprep.subr.mxu0 0.0
    %195 = vmatpush1.msra.mxu0 0.0
    %196 = vmatprep.subr.mxu0 0.0
    %197 = vmatpush1.msra.mxu0 0.0
    %198 = vmatprep.subr.mxu0 0.0
    %199 = vmatpush1.msra.mxu0 0.0
    %200 = vmatprep.subr.mxu0 0.0
    %201 = vmatpush1.msra.mxu0 0.0
    %202 = vmatprep.subr.mxu0 0.0
    %203 = vmatpush1.msra.mxu0 0.0
    %204 = vmatprep.subr.mxu0 0.0
    %205 = vmatpush1.msra.mxu0 0.0
    %206 = vmatprep.subr.mxu0 0.0
    %207 = vmatpush1.msra.mxu0 0.0
    %208 = vmatprep.subr.mxu0 0.0
    %209 = vmatpush1.msra.mxu0 0.0
    %210 = vmatprep.mubr.f32.mxu0 0.0
    %211 = vmatmul.mubr.f32.gmra.mrb[0].mxu0 %v144
    %v212 = vpop.f32.mrb[0].mxu0
    %v213 = vadd.f32 0.0, %v212
    %v214 = vpop.f32.mrb[0].mxu0
    %215 = vdwg.mxu0
    %v216 = vld [vmem:[#allocation7 + $0x28] sm:$0x1]
    %v217 = vlaneseq
    %v218 = vshrl.u32 %v217, 7
    %v219 = vsub.s32 0, %v218
    %v220 = vrot.slane %v216, %v219
    %v221 = vadd.f32 %v213, %v220
    %v222 = vsel %vm61, %v221, -inf
    %223 = vmax.xlane.f32.xlu0 %v222
    %v224 = vpop.xlane.xlu0 %223
    %v225 = vsub.f32 %v221, %v224
    %v226 = vmul.f32 %v225, 1.442695
    %v227 = vpow.pop %v226
    %v228 = vsel %vm61, %v227, 0.0
    %229 = vadd.xlane.f32.xlu0 %v228
    %v230 = vpop.xlane.xlu0 %229
    %v231 = vrcp.pop %v230
    %v232 = vmul.f32 %v227, %v231
    %v233 = vld [vmem:[#allocation7 + $0x30] sm:$0xff]
    %vm234 = vcmask 64512
    %v236 = vsel %vm234, %v53, 0
    %238 = vmatprep.subr.mxu0 0.0
    %239 = vmatpush1.msra.mxu0 %v233
    %240 = vmatprep.subr.mxu0 0.0
    %241 = vmatpush1.msra.mxu0 0.0
    %242 = vmatprep.subr.mxu0 0.0
    %243 = vmatpush1.msra.mxu0 0.0
    %244 = vmatprep.subr.mxu0 0.0
    %245 = vmatpush1.msra.mxu0 0.0
    %246 = vmatprep.subr.mxu0 0.0
    %247 = vmatpush1.msra.mxu0 0.0
    %248 = vmatprep.subr.mxu0 0.0
    %249 = vmatpush1.msra.mxu0 0.0
    %250 = vmatprep.subr.mxu0 0.0
    %251 = vmatpush1.msra.mxu0 0.0
    %252 = vmatprep.subr.mxu0 0.0
    %253 = vmatpush1.msra.mxu0 0.0
    %254 = vmatprep.subr.mxu0 0.0
    %255 = vmatpush1.msra.mxu0 0.0
    %256 = vmatprep.subr.mxu0 0.0
    %257 = vmatpush1.msra.mxu0 0.0
    %258 = vmatprep.subr.mxu0 0.0
    %259 = vmatpush1.msra.mxu0 0.0
    %260 = vmatprep.subr.mxu0 0.0
    %261 = vmatpush1.msra.mxu0 0.0
    %262 = vmatprep.subr.mxu0 0.0
    %263 = vmatpush1.msra.mxu0 0.0
    %264 = vmatprep.subr.mxu0 0.0
    %265 = vmatpush1.msra.mxu0 0.0
    %266 = vmatprep.subr.mxu0 0.0
    %267 = vmatpush1.msra.mxu0 0.0
    %268 = vmatprep.subr.mxu0 0.0
    %269 = vmatpush1.msra.mxu0 0.0
    %270 = vmatprep.subr.mxu0 0.0
    %271 = vmatpush1.msra.mxu0 0.0
    %272 = vmatprep.subr.mxu0 0.0
    %273 = vmatpush1.msra.mxu0 0.0
    %274 = vmatprep.subr.mxu0 0.0
    %275 = vmatpush1.msra.mxu0 0.0
    %276 = vmatprep.subr.mxu0 0.0
    %277 = vmatpush1.msra.mxu0 0.0
    %278 = vmatprep.subr.mxu0 0.0
    %279 = vmatpush1.msra.mxu0 0.0
    %280 = vmatprep.subr.mxu0 0.0
    %281 = vmatpush1.msra.mxu0 0.0
    %282 = vmatprep.subr.mxu0 0.0
    %283 = vmatpush1.msra.mxu0 0.0
    %284 = vmatprep.subr.mxu0 0.0
    %285 = vmatpush1.msra.mxu0 0.0
    %286 = vmatprep.subr.mxu0 0.0
    %287 = vmatpush1.msra.mxu0 0.0
    %288 = vmatprep.subr.mxu0 0.0
    %289 = vmatpush1.msra.mxu0 0.0
    %290 = vmatprep.subr.mxu0 0.0
    %291 = vmatpush1.msra.mxu0 0.0
    %292 = vmatprep.subr.mxu0 0.0
    %293 = vmatpush1.msra.mxu0 0.0
    %294 = vmatprep.subr.mxu0 0.0
    %295 = vmatpush1.msra.mxu0 0.0
    %296 = vmatprep.subr.mxu0 0.0
    %297 = vmatpush1.msra.mxu0 0.0
    %298 = vmatprep.subr.mxu0 0.0
    %299 = vmatpush1.msra.mxu0 0.0
    %300 = vmatprep.subr.mxu0 0.0
    %301 = vmatpush1.msra.mxu0 0.0
    %302 = vmatprep.mubr.f32.mxu0 0.0
    %303 = vmatmul.mubr.f32.gmra.mrb[0].mxu0 %v236
    %v304 = vpop.f32.mrb[0].mxu0
    %v305 = vadd.f32 0.0, %v304
    %v306 = vpop.f32.mrb[0].mxu0
    %307 = vdwg.mxu0
    %309 = vrot.lane.b32.xlu0 %v305, 16
    %v310 = vpop.permute.xlu0 %309
    %v312 = vadd.f32 %v213, %v310
    %v313 = vld [vmem:[#allocation7 + $0x38] sm:$0x1]
    %v314 = vlaneseq
    %v315 = vshrl.u32 %v314, 7
    %v316 = vsub.s32 0, %v315
    %v317 = vrot.slane %v313, %v316
    %319 = vrot.lane.b32.xlu0 %v317, 16
    %v320 = vpop.permute.xlu0 %319
    %v322 = vadd.f32 %v312, %v320
    %v323 = vmax.f32 %v322, 0.0
    %v324 = vld [vmem:[#allocation7 + $0x40] sm:$0xff]
    %v325 = vld [vmem:[#allocation7 + $0x48] sm:$0xff]
    %v326 = vld [vmem:[#allocation7 + $0x50] sm:$0x1]
    %v327 = vlaneseq
    %v328 = vshrl.u32 %v327, 7
    %v329 = vsub.s32 0, %v328
    %v330 = vrot.slane %v326, %v329
    %332 = vrot.lane.b32.xlu0 %v323, 112
    %v333 = vpop.permute.xlu0 %332
    %v334 = vsel %vm61, %v333, 0
    %336 = vmatprep.subr.mxu0 0.0
    %337 = vmatpush1.msra.mxu0 %v324
    %338 = vmatprep.subr.mxu0 0.0
    %339 = vmatpush1.msra.mxu0 %v325
    %340 = vmatprep.subr.mxu0 0.0
    %341 = vmatpush1.msra.mxu0 0.0
    %342 = vmatprep.subr.mxu0 0.0
    %343 = vmatpush1.msra.mxu0 0.0
    %344 = vmatprep.subr.mxu0 0.0
    %345 = vmatpush1.msra.mxu0 0.0
    %346 = vmatprep.subr.mxu0 0.0
    %347 = vmatpush1.msra.mxu0 0.0
    %348 = vmatprep.subr.mxu0 0.0
    %349 = vmatpush1.msra.mxu0 0.0
    %350 = vmatprep.subr.mxu0 0.0
    %351 = vmatpush1.msra.mxu0 0.0
    %352 = vmatprep.subr.mxu0 0.0
    %353 = vmatpush1.msra.mxu0 0.0
    %354 = vmatprep.subr.mxu0 0.0
    %355 = vmatpush1.msra.mxu0 0.0
    %356 = vmatprep.subr.mxu0 0.0
    %357 = vmatpush1.msra.mxu0 0.0
    %358 = vmatprep.subr.mxu0 0.0
    %359 = vmatpush1.msra.mxu0 0.0
    %360 = vmatprep.subr.mxu0 0.0
    %361 = vmatpush1.msra.mxu0 0.0
    %362 = vmatprep.subr.mxu0 0.0
    %363 = vmatpush1.msra.mxu0 0.0
    %364 = vmatprep.subr.mxu0 0.0
    %365 = vmatpush1.msra.mxu0 0.0
    %366 = vmatprep.subr.mxu0 0.0
    %367 = vmatpush1.msra.mxu0 0.0
    %368 = vmatprep.subr.mxu0 0.0
    %369 = vmatpush1.msra.mxu0 0.0
    %370 = vmatprep.subr.mxu0 0.0
    %371 = vmatpush1.msra.mxu0 0.0
    %372 = vmatprep.subr.mxu0 0.0
    %373 = vmatpush1.msra.mxu0 0.0
    %374 = vmatprep.subr.mxu0 0.0
    %375 = vmatpush1.msra.mxu0 0.0
    %376 = vmatprep.subr.mxu0 0.0
    %377 = vmatpush1.msra.mxu0 0.0
    %378 = vmatprep.subr.mxu0 0.0
    %379 = vmatpush1.msra.mxu0 0.0
    %380 = vmatprep.subr.mxu0 0.0
    %381 = vmatpush1.msra.mxu0 0.0
    %382 = vmatprep.subr.mxu0 0.0
    %383 = vmatpush1.msra.mxu0 0.0
    %384 = vmatprep.subr.mxu0 0.0
    %385 = vmatpush1.msra.mxu0 0.0
    %386 = vmatprep.subr.mxu0 0.0
    %387 = vmatpush1.msra.mxu0 0.0
    %388 = vmatprep.subr.mxu0 0.0
    %389 = vmatpush1.msra.mxu0 0.0
    %390 = vmatprep.subr.mxu0 0.0
    %391 = vmatpush1.msra.mxu0 0.0
    %392 = vmatprep.subr.mxu0 0.0
    %393 = vmatpush1.msra.mxu0 0.0
    %394 = vmatprep.subr.mxu0 0.0
    %395 = vmatpush1.msra.mxu0 0.0
    %396 = vmatprep.subr.mxu0 0.0
    %397 = vmatpush1.msra.mxu0 0.0
    %398 = vmatprep.subr.mxu0 0.0
    %399 = vmatpush1.msra.mxu0 0.0
    %400 = vmatprep.mubr.f32.mxu0 0.0
    %401 = vmatmul.mubr.f32.gmra.mrb[0].mxu0 %v334
    %v402 = vpop.f32.mrb[0].mxu0
    %v403 = vadd.f32 %v330, %v402
    %v404 = vpop.f32.mrb[0].mxu0
    %405 = vdwg.mxu0
    %v406 = vmax.f32 %v403, 0.0
    %v407 = vld [vmem:[#allocation7 + $0x58] sm:$0xff]
    %v408 = vld [vmem:[#allocation7 + $0x60] sm:$0xff]
    %v409 = vld [vmem:[#allocation7 + $0x68] sm:$0x1]
    %v410 = vlaneseq
    %v411 = vshrl.u32 %v410, 7
    %v412 = vsub.s32 0, %v411
    %v413 = vrot.slane %v409, %v412
    %v415 = vsel %vm61, %v406, 0
    %417 = vmatprep.subr.mxu0 0.0
    %418 = vmatpush1.msra.mxu0 %v407
    %419 = vmatprep.subr.mxu0 0.0
    %420 = vmatpush1.msra.mxu0 %v408
    %421 = vmatprep.subr.mxu0 0.0
    %422 = vmatpush1.msra.mxu0 0.0
    %423 = vmatprep.subr.mxu0 0.0
    %424 = vmatpush1.msra.mxu0 0.0
    %425 = vmatprep.subr.mxu0 0.0
    %426 = vmatpush1.msra.mxu0 0.0
    %427 = vmatprep.subr.mxu0 0.0
    %428 = vmatpush1.msra.mxu0 0.0
    %429 = vmatprep.subr.mxu0 0.0
    %430 = vmatpush1.msra.mxu0 0.0
    %431 = vmatprep.subr.mxu0 0.0
    %432 = vmatpush1.msra.mxu0 0.0
    %433 = vmatprep.subr.mxu0 0.0
    %434 = vmatpush1.msra.mxu0 0.0
    %435 = vmatprep.subr.mxu0 0.0
    %436 = vmatpush1.msra.mxu0 0.0
    %437 = vmatprep.subr.mxu0 0.0
    %438 = vmatpush1.msra.mxu0 0.0
    %439 = vmatprep.subr.mxu0 0.0
    %440 = vmatpush1.msra.mxu0 0.0
    %441 = vmatprep.subr.mxu0 0.0
    %442 = vmatpush1.msra.mxu0 0.0
    %443 = vmatprep.subr.mxu0 0.0
    %444 = vmatpush1.msra.mxu0 0.0
    %445 = vmatprep.subr.mxu0 0.0
    %446 = vmatpush1.msra.mxu0 0.0
    %447 = vmatprep.subr.mxu0 0.0
    %448 = vmatpush1.msra.mxu0 0.0
    %449 = vmatprep.subr.mxu0 0.0
    %450 = vmatpush1.msra.mxu0 0.0
    %451 = vmatprep.subr.mxu0 0.0
    %452 = vmatpush1.msra.mxu0 0.0
    %453 = vmatprep.subr.mxu0 0.0
    %454 = vmatpush1.msra.mxu0 0.0
    %455 = vmatprep.subr.mxu0 0.0
    %456 = vmatpush1.msra.mxu0 0.0
    %457 = vmatprep.subr.mxu0 0.0
    %458 = vmatpush1.msra.mxu0 0.0
    %459 = vmatprep.subr.mxu0 0.0
    %460 = vmatpush1.msra.mxu0 0.0
    %461 = vmatprep.subr.mxu0 0.0
    %462 = vmatpush1.msra.mxu0 0.0
    %463 = vmatprep.subr.mxu0 0.0
    %464 = vmatpush1.msra.mxu0 0.0
    %465 = vmatprep.subr.mxu0 0.0
    %466 = vmatpush1.msra.mxu0 0.0
    %467 = vmatprep.subr.mxu0 0.0
    %468 = vmatpush1.msra.mxu0 0.0
    %469 = vmatprep.subr.mxu0 0.0
    %470 = vmatpush1.msra.mxu0 0.0
    %471 = vmatprep.subr.mxu0 0.0
    %472 = vmatpush1.msra.mxu0 0.0
    %473 = vmatprep.subr.mxu0 0.0
    %474 = vmatpush1.msra.mxu0 0.0
    %475 = vmatprep.subr.mxu0 0.0
    %476 = vmatpush1.msra.mxu0 0.0
    %477 = vmatprep.subr.mxu0 0.0
    %478 = vmatpush1.msra.mxu0 0.0
    %479 = vmatprep.subr.mxu0 0.0
    %480 = vmatpush1.msra.mxu0 0.0
    %481 = vmatprep.mubr.f32.mxu0 0.0
    %482 = vmatmul.mubr.f32.gmra.mrb[0].mxu0 %v415
    %v483 = vpop.f32.mrb[0].mxu0
    %v484 = vadd.f32 %v413, %v483
    %v485 = vpop.f32.mrb[0].mxu0
    %486 = vdwg.mxu0
    %v487 = vmax.f32 %v484, 0.0
    %v488 = vld [vmem:[#allocation7 + $0x70] sm:$0xff]
    %v489 = vld [vmem:[#allocation7 + $0x78] sm:$0xff]
    %v490 = vld [vmem:[#allocation7 + $0x80] sm:$0x1]
    %v491 = vlaneseq
    %v492 = vshrl.u32 %v491, 7
    %v493 = vsub.s32 0, %v492
    %v494 = vrot.slane %v490, %v493
    %v496 = vsel %vm61, %v487, 0
    %498 = vmatprep.subr.mxu0 0.0
    %499 = vmatpush1.msra.mxu0 %v488
    %500 = vmatprep.subr.mxu0 0.0
    %501 = vmatpush1.msra.mxu0 %v489
    %502 = vmatprep.subr.mxu0 0.0
    %503 = vmatpush1.msra.mxu0 0.0
    %504 = vmatprep.subr.mxu0 0.0
    %505 = vmatpush1.msra.mxu0 0.0
    %506 = vmatprep.subr.mxu0 0.0
    %507 = vmatpush1.msra.mxu0 0.0
    %508 = vmatprep.subr.mxu0 0.0
    %509 = vmatpush1.msra.mxu0 0.0
    %510 = vmatprep.subr.mxu0 0.0
    %511 = vmatpush1.msra.mxu0 0.0
    %512 = vmatprep.subr.mxu0 0.0
    %513 = vmatpush1.msra.mxu0 0.0
    %514 = vmatprep.subr.mxu0 0.0
    %515 = vmatpush1.msra.mxu0 0.0
    %516 = vmatprep.subr.mxu0 0.0
    %517 = vmatpush1.msra.mxu0 0.0
    %518 = vmatprep.subr.mxu0 0.0
    %519 = vmatpush1.msra.mxu0 0.0
    %520 = vmatprep.subr.mxu0 0.0
    %521 = vmatpush1.msra.mxu0 0.0
    %522 = vmatprep.subr.mxu0 0.0
    %523 = vmatpush1.msra.mxu0 0.0
    %524 = vmatprep.subr.mxu0 0.0
    %525 = vmatpush1.msra.mxu0 0.0
    %526 = vmatprep.subr.mxu0 0.0
    %527 = vmatpush1.msra.mxu0 0.0
    %528 = vmatprep.subr.mxu0 0.0
    %529 = vmatpush1.msra.mxu0 0.0
    %530 = vmatprep.subr.mxu0 0.0
    %531 = vmatpush1.msra.mxu0 0.0
    %532 = vmatprep.subr.mxu0 0.0
    %533 = vmatpush1.msra.mxu0 0.0
    %534 = vmatprep.subr.mxu0 0.0
    %535 = vmatpush1.msra.mxu0 0.0
    %536 = vmatprep.subr.mxu0 0.0
    %537 = vmatpush1.msra.mxu0 0.0
    %538 = vmatprep.subr.mxu0 0.0
    %539 = vmatpush1.msra.mxu0 0.0
    %540 = vmatprep.subr.mxu0 0.0
    %541 = vmatpush1.msra.mxu0 0.0
    %542 = vmatprep.subr.mxu0 0.0
    %543 = vmatpush1.msra.mxu0 0.0
    %544 = vmatprep.subr.mxu0 0.0
    %545 = vmatpush1.msra.mxu0 0.0
    %546 = vmatprep.subr.mxu0 0.0
    %547 = vmatpush1.msra.mxu0 0.0
    %548 = vmatprep.subr.mxu0 0.0
    %549 = vmatpush1.msra.mxu0 0.0
    %550 = vmatprep.subr.mxu0 0.0
    %551 = vmatpush1.msra.mxu0 0.0
    %552 = vmatprep.subr.mxu0 0.0
    %553 = vmatpush1.msra.mxu0 0.0
    %554 = vmatprep.subr.mxu0 0.0
    %555 = vmatpush1.msra.mxu0 0.0
    %556 = vmatprep.subr.mxu0 0.0
    %557 = vmatpush1.msra.mxu0 0.0
    %558 = vmatprep.subr.mxu0 0.0
    %559 = vmatpush1.msra.mxu0 0.0
    %560 = vmatprep.subr.mxu0 0.0
    %561 = vmatpush1.msra.mxu0 0.0
    %562 = vmatprep.mubr.f32.mxu0 0.0
    %563 = vmatmul.mubr.f32.gmra.mrb[0].mxu0 %v496
    %v564 = vpop.f32.mrb[0].mxu0
    %v565 = vadd.f32 %v494, %v564
    %v566 = vpop.f32.mrb[0].mxu0
    %567 = vdwg.mxu0
    %v568 = vmax.f32 %v565, 0.0
    %v569 = vld [vmem:[#allocation7 + $0x88] sm:$0x1]
    %v570 = vlaneseq
    %v571 = vshrl.u32 %v570, 7
    %v572 = vsub.s32 0, %v571
    %v573 = vrot.slane %v569, %v572
    %v574 = vmul.f32 %v568, %v573
    %v575 = vsel %vm61, %v574, 0.0
    %576 = vadd.xlane.f32.xlu0 %v575
    %v577 = vpop.xlane.xlu0 %576
    %v578 = vld [vmem:[#allocation7 + $0x90] sm:$0x1]
    %v579 = vlaneseq
    %v580 = vshrl.u32 %v579, 7
    %v581 = vsub.s32 0, %v580
    %v582 = vrot.slane %v578, %v581
    %v583 = vadd.f32 %v577, %v582
    %vm584 = vcmask 7168
    %585 = vst.msk [vmem:[#allocation8] sm:$0xff] %vm584, %v583
    %587 = vrot.lane.b32.xlu0 %v568, 1
    %v588 = vpop.permute.xlu0 %587
    %vm590 = vcmask 138248
    %591 = vst.msk [vmem:[#allocation8] sm:$0xff] %vm590, %v588
    %593 = vrot.lane.b32.xlu0 %v232, 17
    %v594 = vpop.permute.xlu0 %593
    %vm596 = vcmask 269448
    %597 = vst.msk [vmem:[#allocation8] sm:$0xff] %vm596, %v594
    %598 = vrot.lane.b32.xlu0 %v140, 33
    %v599 = vpop.permute.xlu0 %598
    %vm601 = vcmask 400648
    %602 = vst.msk [vmem:[#allocation8] sm:$0xff] %vm601, %v599
    // Predicated region
    $region26: #{tpu_custom_call.1} parent=1 // pred_check
      _
    $region27: #{tpu_custom_call.1} parent=1 // pred_check_branch
      %604 = sbr.rel (0) target = $region29
    $region28: #{tpu_custom_call.1} parent=1 // pred_region
      %s606 = ssub.s32 128, 128
      %607 = vsyncadd [#allocation4], %s606
      %s609 = sshll.u32 [#allocation8], 4
      %s610 = int_to_ptr.vmem [resolvable:$true] %s609
      %612 = dma.vmem_to_hbm [thread:$0]  %s610, 128, %s3, [#allocation4]
    $region29: #{tpu_custom_call.1} parent=1 // pred_fallthru
      _
    // Predicated region
    $region30: #{tpu_custom_call.1} parent=1 // pred_check
      _
    $region31: #{tpu_custom_call.1} parent=1 // pred_check_branch
      %614 = sbr.rel (0) target = $region33
    $region32: #{tpu_custom_call.1} parent=1 // pred_region
      %615 = dma.done [#allocation4], 128
    $region33: #{tpu_custom_call.1} parent=1 // pred_fallthru
      _
    %616 = vsyncpa [#allocation3], 1
    %617 = vsyncpa [#allocation6], 1
    %618 = vsyncpa [#allocation4], 1

</llo_original>
